<compile_context>
chip_gen: v5e
topology: v5e:2x2
jax: 0.10.0
libtpu: 0.0.40
codegen_flags: <defaults>
</compile_context>

<pallas_src>
import math

import jax
import jax.numpy as jnp
from jax import lax
from jax.experimental import pallas as pl
from jax.experimental.pallas import tpu as pltpu


LANES = 128
SUBLANES = 8


# ----------------------------------------------------------------------------
# Deterministic parameter init (mirrors nn.init.orthogonal_ / zeros)
# ----------------------------------------------------------------------------
def orthogonal(key, shape, dtype=jnp.float32):
    d0, d1 = shape
    n, m = max(d0, d1), min(d0, d1)
    a = jax.random.normal(key, (n, m), dtype=jnp.float32)
    q, r = jnp.linalg.qr(a)
    d = jnp.sign(jnp.diag(r))
    d = jnp.where(d == 0, 1.0, d)
    q = q * d[None, :]
    w = q if (d0 >= d1) else q.T
    return w.astype(dtype)


def init_policy_params(key, layer_sizes):
    """Replicates Policy.__init__ (dotp=True) parameter shapes."""
    n_layers = len(layer_sizes) - 1
    weights, biases = [], []
    s_weights, s_biases, g_weights, g_biases = [], [], [], []
    keys = jax.random.split(key, 4 * n_layers)
    kidx = 0
    for i in range(n_layers):
        dim0 = layer_sizes[i]
        dim1 = layer_sizes[i + 1]
        if i == 0:
            dim0 = layer_sizes[0] + layer_sizes[-2]
        weights.append(orthogonal(keys[kidx], (dim0, dim1))); kidx += 1
        biases.append(jnp.zeros((1, dim1), jnp.float32))
        if i == 0:
            dim0 = layer_sizes[0] // 2
        else:
            dim0 = layer_sizes[i]
        if i == n_layers - 1:
            break
        s_weights.append(orthogonal(keys[kidx], (dim0, dim1))); kidx += 1
        g_weights.append(orthogonal(keys[kidx], (dim0, dim1))); kidx += 1
        s_biases.append(jnp.zeros((1, dim1), jnp.float32))
        g_biases.append(jnp.zeros((1, dim1), jnp.float32))
    return dict(weights=weights, biases=biases,
                s_weights=s_weights, s_biases=s_biases,
                g_weights=g_weights, g_biases=g_biases)


# ----------------------------------------------------------------------------
# One-time wrapper-side parameter packing (transposed, feature-major)
# ----------------------------------------------------------------------------
def _pad_rows(r):
    return ((r + SUBLANES - 1) // SUBLANES) * SUBLANES


def pack_policy_params(params, layer_sizes):
    """Builds (slab, metas).

    slab : (total_rows, 128) f32 — every parameter stored TRANSPOSED
           (out_features as rows, in_features as lanes), row-blocks aligned to
           8 sublanes.  One DMA brings all weights into VMEM.
    metas: tuple of (row_offset, rows, cols) in kernel consumption order:
             [swT, sbT] * n_sg, [gwT, gbT] * n_sg,
             w0T_state, w0T_goal, w0T_prod, b0T, [wT, bT] * (n_mlp - 1)
    """
    assert len(layer_sizes) >= 3, "dotp Policy needs >= 3 layer sizes"
    sd = layer_sizes[0] // 2
    sgdim = layer_sizes[0]
    # TODO(synk): multi-lane-block packing for input feature dims > 128.
    assert max([sd] + list(layer_sizes[1:-1])) <= LANES, \
        "packed slab assumes every layer input width <= 128"

    mats = []
    for sw, sb in zip(params["s_weights"], params["s_biases"]):
        mats.append(sw.T); mats.append(sb.T)            # (d1, d0), (d1, 1)
    for gw, gb in zip(params["g_weights"], params["g_biases"]):
        mats.append(gw.T); mats.append(gb.T)
    # First MLP weight split by input rows so the kernel needs no concat:
    #   cat([state, goal, s*g]) @ w0
    #     == state @ w0[:sd] + goal @ w0[sd:sgdim] + (s*g) @ w0[sgdim:]
    w0 = params["weights"][0]
    mats.append(w0[:sd, :].T)                            # (d1, sd)
    mats.append(w0[sd:sgdim, :].T)                       # (d1, gd)
    mats.append(w0[sgdim:, :].T)                         # (d1, h_last)
    mats.append(params["biases"][0].T)                   # (d1, 1)
    for w, b in zip(params["weights"][1:], params["biases"][1:]):
        mats.append(w.T); mats.append(b.T)

    metas, padded, off = [], [], 0
    for m in mats:
        r, c = m.shape
        pr = _pad_rows(r)
        buf = jnp.zeros((pr, LANES), jnp.float32).at[:r, :c].set(
            m.astype(jnp.float32))
        padded.append(buf)
        metas.append((off, r, c))
        off += pr
    slab = jnp.concatenate(padded, axis=0)
    return slab, tuple(metas)


# ----------------------------------------------------------------------------
# Pallas kernel (feature-major: activations are (features, Bb), batch on lanes)
# ----------------------------------------------------------------------------
def make_policy_kernel(metas, n_sg, n_mlp, act_dim):
    metas = tuple(metas)
    NT = (((1,), (1,)), ((), ()))        # contract both minor dims: A @ B^T

    def take(ref, meta):
        off, r, c = meta
        return ref[off:off + r, :c]      # static slice, aligned row offset

    def kernel(state_ref, goal_ref, eps_ref, p_ref, act_ref, lp_ref):
        f32 = jnp.float32
        it = iter(metas)

        state_bm = state_ref[...]        # (Bb, sd)   batch-major tile
        goal_bm = goal_ref[...]          # (Bb, gd)
        eps = eps_ref[...]               # (act_dim, Bb)  feature-major noise

        s_metas = [next(it) for _ in range(2 * n_sg)]
        g_metas = [next(it) for _ in range(2 * n_sg)]

        def tower(x_bm, wbs):
            # Layer 0 folds the batch->lane transpose into the contraction:
            #   (d1, d0) x (Bb, d0) contracted over d0 -> (d1, Bb)
            w = take(p_ref, wbs[0]); b = take(p_ref, wbs[1])
            h = lax.dot_general(w, x_bm, NT, preferred_element_type=f32) + b
            for li in range(1, len(wbs) // 2):
                w = take(p_ref, wbs[2 * li]); b = take(p_ref, wbs[2 * li + 1])
                h = jnp.dot(w, h, preferred_element_type=f32) + b
            return h

        s = tower(state_bm, s_metas)     # (h, Bb)
        g = tower(goal_bm, g_metas)      # (h, Bb)
        prod = s * g                     # lane-dense elementwise

        # First MLP layer without a concat: three dots summed.
        w0s = take(p_ref, next(it)); w0g = take(p_ref, next(it))
        w0p = take(p_ref, next(it)); b0 = take(p_ref, next(it))
        x = (lax.dot_general(w0s, state_bm, NT, preferred_element_type=f32)
             + lax.dot_general(w0g, goal_bm, NT, preferred_element_type=f32)
             + jnp.dot(w0p, prod, preferred_element_type=f32)
             + b0)
        if n_mlp > 1:
            x = jnp.maximum(x, 0.0)
        for i in range(1, n_mlp):
            w = take(p_ref, next(it)); b = take(p_ref, next(it))
            x = jnp.dot(w, x, preferred_element_type=f32) + b
            if i < n_mlp - 1:
                x = jnp.maximum(x, 0.0)

        # x: (2*act_dim, Bb); split along sublanes (features).
        mean = x[:act_dim, :]
        log_std = x[act_dim:, :]
        # NOTE: reference module applies no log_std clamp; semantics preserved.
        std = jnp.exp(log_std)

        raw = mean + std * eps           # reparameterized Normal sample
        two_raw = 2.0 * raw
        abs2 = jnp.abs(two_raw)
        e = jnp.exp(-abs2)               # shared between tanh and softplus
        # tanh(raw) = sign(raw) * (1 - e) / (1 + e)
        act_ref[...] = jnp.where(raw >= 0.0, 1.0, -1.0) * (1.0 - e) / (1.0 + e)

        # Normal log-prob of the sample minus the tanh-squash correction,
        # fused into one per-element term and one sublane sum:
        #   lp   = -eps^2/2 - log_std - 0.5*log(2*pi)
        #   corr = 2*raw + log(4) - 2*softplus(2*raw) = -|2*raw| + log4 - 2*log1p(e)
        lp_elem = (-0.5 * eps * eps - log_std - 0.5 * math.log(2.0 * math.pi)
                   + abs2 - math.log(4.0) + 2.0 * jnp.log1p(e))
        lp_ref[...] = jnp.sum(lp_elem, axis=0, keepdims=True)   # (1, Bb)

    return kernel


# ----------------------------------------------------------------------------
# Wrapper
# ----------------------------------------------------------------------------
def policy_forward(state, goal, eps, packed, layer_sizes, *, block_cap=4096):
    """Full Policy.forward (dotp=True).

    state: (B, sd), goal: (B, gd), eps: (B, act_dim) reparameterization noise.
    packed = pack_policy_params(params, layer_sizes)  (build once, reuse).
    Returns (action [B, act_dim], log_prob [B]).
    """
    slab, metas = packed
    state = jnp.asarray(state, jnp.float32)
    goal = jnp.asarray(goal, jnp.float32)
    eps = jnp.asarray(eps, jnp.float32)

    # Singleton-batch broadcasting (mirrors the .repeat in the torch module).
    if state.shape[0] == 1:
        state = jnp.tile(state, (goal.shape[0], 1))
    if goal.shape[0] == 1:
        goal = jnp.tile(goal, (state.shape[0], 1))

    B = state.shape[0]
    sd = state.shape[1]
    gd = goal.shape[1]
    act_dim = layer_sizes[-1] // 2
    n_sg = len(layer_sizes) - 2
    n_mlp = len(layer_sizes) - 1

    # Noise goes in feature-major (act_dim lanes-wide transpose: tiny plumb).
    assert eps.shape == (B, act_dim)
    eps_t = eps.T                                       # (act_dim, B)

    # Batch block: lane-aligned, capped, >= 2 grid steps when B allows
    # (v7x has 2 TensorCores; "parallel" splits the batch across them).
    blk = min(block_cap, max(LANES, (pl.cdiv(B, 2) // LANES) * LANES))
    steps = pl.cdiv(B, blk)
    B_pad = steps * blk
    if B_pad != B:                                      # masked tail via padding
        state = jnp.pad(state, ((0, B_pad - B), (0, 0)))
        goal = jnp.pad(goal, ((0, B_pad - B), (0, 0)))
        eps_t = jnp.pad(eps_t, ((0, 0), (0, B_pad - B)))

    kernel = make_policy_kernel(metas, n_sg, n_mlp, act_dim)

    out_act, out_lp = pl.pallas_call(
        kernel,
        out_shape=(jax.ShapeDtypeStruct((act_dim, B_pad), jnp.float32),
                   jax.ShapeDtypeStruct((1, B_pad), jnp.float32)),
        grid=(steps,),
        in_specs=[
            pl.BlockSpec((blk, sd), lambda i: (i, 0)),
            pl.BlockSpec((blk, gd), lambda i: (i, 0)),
            pl.BlockSpec((act_dim, blk), lambda i: (0, i)),
            # Weight slab: constant block index -> DMA'd once, stays resident.
            pl.BlockSpec(slab.shape, lambda i: (0, 0)),
        ],
        out_specs=(
            pl.BlockSpec((act_dim, blk), lambda i: (0, i)),   # lane-dense store
            pl.BlockSpec((1, blk), lambda i: (0, i)),
        ),
        compiler_params=pltpu.CompilerParams(
            dimension_semantics=("parallel",)),
    )(state, goal, eps_t, slab)

    action = out_act[:, :B].T           # (B, act_dim)
    log_prob = out_lp[0, :B]            # (B,)
    return action, log_prob


# ----------------------------------------------------------------------------
# Pure-JAX reference for a sanity check
# ----------------------------------------------------------------------------
def policy_forward_ref(state, goal, eps, params, layer_sizes):
    s, g = state, goal
    for sw, sb, gw, gb in zip(params["s_weights"], params["s_biases"],
                              params["g_weights"], params["g_biases"]):
        s = s @ sw + sb
        g = g @ gw + gb
    x = jnp.concatenate([state, goal, s * g], axis=1)
    nw = len(params["weights"])
    for i, (w, b) in enumerate(zip(params["weights"], params["biases"])):
        x = x @ w + b
        if i < nw - 1:
            x = jax.nn.relu(x)
    act_dim = x.shape[1] // 2
    mean, log_std = x[:, :act_dim], x[:, act_dim:]
    std = jnp.exp(log_std)
    raw = mean + std * eps
    action = jnp.tanh(raw)
    raw_lp = jnp.sum(-0.5 * eps * eps - log_std - 0.5 * math.log(2 * math.pi), axis=1)
    corr = jnp.sum(2 * raw + math.log(4.0) - 2 * jax.nn.softplus(2 * raw), axis=1)
    return action, raw_lp - corr


# ----------------------------------------------------------------------------
if __name__ == "__main__":
    # Small Policy: layer_sizes = [32, 32, 32, 8]
    #   state dim = goal dim = layer_sizes[0] // 2 = 16
    #   action dim = layer_sizes[-1] // 2 = 4
    layer_sizes = [32, 32, 32, 8]
    state_dim = layer_sizes[0] // 2
    act_dim = layer_sizes[-1] // 2

    key = jax.random.PRNGKey(0)
    k_params, k_state, k_goal, k_eps = jax.random.split(key, 4)

    params = init_policy_params(k_params, layer_sizes)
    packed = pack_policy_params(params, layer_sizes)    # built once, reused

    # --- small batch (pads to one 128-lane block, 1 grid step) --------------
    B = 8
    state = jax.random.normal(k_state, (B, state_dim), dtype=jnp.float32)
    goal = jax.random.normal(k_goal, (B, state_dim), dtype=jnp.float32)
    # sampling noise generated outside the kernel (deterministic reparam trick)
    eps = jax.random.normal(k_eps, (B, act_dim), dtype=jnp.float32)

    action, log_prob = policy_forward(state, goal, eps, packed, layer_sizes)
    jax.block_until_ready((action, log_prob))

    action_ref, log_prob_ref = policy_forward_ref(state, goal, eps, params, layer_sizes)
    assert action.shape == (B, act_dim) and log_prob.shape == (B,)
    assert jnp.allclose(action, action_ref, atol=1e-4, rtol=1e-4)
    assert jnp.allclose(log_prob, log_prob_ref, atol=1e-3, rtol=1e-3)

    # --- larger, non-block-multiple batch (padded tail + multi-step grid) ---
    B2 = 1000
    k_s2, k_g2, k_e2 = jax.random.split(jax.random.PRNGKey(1), 3)
    state2 = jax.random.normal(k_s2, (B2, state_dim), dtype=jnp.float32)
    goal2 = jax.random.normal(k_g2, (B2, state_dim), dtype=jnp.float32)
    eps2 = jax.random.normal(k_e2, (B2, act_dim), dtype=jnp.float32)

    action2, log_prob2 = policy_forward(state2, goal2, eps2, packed, layer_sizes)
    jax.block_until_ready((action2, log_prob2))
    action2_ref, log_prob2_ref = policy_forward_ref(state2, goal2, eps2, params,
                                                    layer_sizes)
    assert action2.shape == (B2, act_dim) and log_prob2.shape == (B2,)
    assert jnp.allclose(action2, action2_ref, atol=1e-4, rtol=1e-4)
    assert jnp.allclose(log_prob2, log_prob2_ref, atol=1e-3, rtol=1e-3)

    print("KERNEL_OK")
</pallas_src>

<mosaic_0001>
module attributes {stable_mosaic.version = 11 : i64} {
  func.func @kernel(%arg0: i32, %arg1: memref<128x16xf32, #tpu.memory_space<vmem>>, %arg2: memref<128x16xf32, #tpu.memory_space<vmem>>, %arg3: memref<4x128xf32, #tpu.memory_space<vmem>>, %arg4: memref<464x128xf32, #tpu.memory_space<vmem>>, %arg5: memref<4x128xf32, #tpu.memory_space<vmem>>, %arg6: memref<1x128xf32, #tpu.memory_space<vmem>>) attributes {dimension_semantics = [#tpu.dimension_semantics<parallel>], iteration_bounds = array<i64: 1>, scalar_prefetch = 0 : i64, scratch_operands = 0 : i64, tpu.core_type = #tpu.core_type<tc>, window_params = [{transform_indices = @transform_0, window_bounds = array<i64: 128, 16>}, {transform_indices = @transform_1, window_bounds = array<i64: 128, 16>}, {transform_indices = @transform_2, window_bounds = array<i64: 4, 128>}, {pipeline_mode = #tpu.pipeline_mode<synchronous>, transform_indices = @transform_3, window_bounds = array<i64: 464, 128>}, {transform_indices = @transform_4, window_bounds = array<i64: 4, 128>}, {transform_indices = @transform_5, window_bounds = array<i64: 1, 128>}]} {
    %c0 = arith.constant 0 : index
    %c0_0 = arith.constant 0 : index
    %0 = vector.load %arg1[%c0, %c0_0] : memref<128x16xf32, #tpu.memory_space<vmem>>, vector<128x16xf32>
    %c0_1 = arith.constant 0 : index
    %c0_2 = arith.constant 0 : index
    %1 = vector.load %arg2[%c0_1, %c0_2] : memref<128x16xf32, #tpu.memory_space<vmem>>, vector<128x16xf32>
    %c0_3 = arith.constant 0 : index
    %c0_4 = arith.constant 0 : index
    %2 = vector.load %arg3[%c0_3, %c0_4] : memref<4x128xf32, #tpu.memory_space<vmem>>, vector<4x128xf32>
    %c0_5 = arith.constant 0 : index
    %c0_6 = arith.constant 0 : index
    %3 = vector.load %arg4[%c0_5, %c0_6] : memref<464x128xf32, #tpu.memory_space<vmem>>, vector<32x16xf32>
    %c32 = arith.constant 32 : index
    %c0_7 = arith.constant 0 : index
    %4 = vector.load %arg4[%c32, %c0_7] : memref<464x128xf32, #tpu.memory_space<vmem>>, vector<32x1xf32>
    %cst = arith.constant dense<0.000000e+00> : vector<32x128xf32>
    %5 = tpu.matmul %3, %0, %cst {dimension_numbers = #tpu.dot_dimension_numbers<[1], [1], [0], [0], [0, 0, 1, 0], [], []>} : vector<32x16xf32>, vector<128x16xf32>, vector<32x128xf32> -> vector<32x128xf32>
    %6 = vector.broadcast %4 : vector<32x1xf32> to vector<32x128xf32>
    %7 = arith.addf %5, %6 : vector<32x128xf32>
    %c64 = arith.constant 64 : index
    %c0_8 = arith.constant 0 : index
    %8 = vector.load %arg4[%c64, %c0_8] : memref<464x128xf32, #tpu.memory_space<vmem>>, vector<32x32xf32>
    %c96 = arith.constant 96 : index
    %c0_9 = arith.constant 0 : index
    %9 = vector.load %arg4[%c96, %c0_9] : memref<464x128xf32, #tpu.memory_space<vmem>>, vector<32x1xf32>
    %cst_10 = arith.constant dense<0.000000e+00> : vector<32x128xf32>
    %10 = tpu.matmul %8, %7, %cst_10 {dimension_numbers = #tpu.dot_dimension_numbers<[1], [0], [0], [1], [0, 0, 1, 1], [], []>} : vector<32x32xf32>, vector<32x128xf32>, vector<32x128xf32> -> vector<32x128xf32>
    %11 = vector.broadcast %9 : vector<32x1xf32> to vector<32x128xf32>
    %12 = arith.addf %10, %11 : vector<32x128xf32>
    %c128 = arith.constant 128 : index
    %c0_11 = arith.constant 0 : index
    %13 = vector.load %arg4[%c128, %c0_11] : memref<464x128xf32, #tpu.memory_space<vmem>>, vector<32x16xf32>
    %c160 = arith.constant 160 : index
    %c0_12 = arith.constant 0 : index
    %14 = vector.load %arg4[%c160, %c0_12] : memref<464x128xf32, #tpu.memory_space<vmem>>, vector<32x1xf32>
    %cst_13 = arith.constant dense<0.000000e+00> : vector<32x128xf32>
    %15 = tpu.matmul %13, %1, %cst_13 {dimension_numbers = #tpu.dot_dimension_numbers<[1], [1], [0], [0], [0, 0, 1, 0], [], []>} : vector<32x16xf32>, vector<128x16xf32>, vector<32x128xf32> -> vector<32x128xf32>
    %16 = vector.broadcast %14 : vector<32x1xf32> to vector<32x128xf32>
    %17 = arith.addf %15, %16 : vector<32x128xf32>
    %c192 = arith.constant 192 : index
    %c0_14 = arith.constant 0 : index
    %18 = vector.load %arg4[%c192, %c0_14] : memref<464x128xf32, #tpu.memory_space<vmem>>, vector<32x32xf32>
    %c224 = arith.constant 224 : index
    %c0_15 = arith.constant 0 : index
    %19 = vector.load %arg4[%c224, %c0_15] : memref<464x128xf32, #tpu.memory_space<vmem>>, vector<32x1xf32>
    %cst_16 = arith.constant dense<0.000000e+00> : vector<32x128xf32>
    %20 = tpu.matmul %18, %17, %cst_16 {dimension_numbers = #tpu.dot_dimension_numbers<[1], [0], [0], [1], [0, 0, 1, 1], [], []>} : vector<32x32xf32>, vector<32x128xf32>, vector<32x128xf32> -> vector<32x128xf32>
    %21 = vector.broadcast %19 : vector<32x1xf32> to vector<32x128xf32>
    %22 = arith.addf %20, %21 : vector<32x128xf32>
    %23 = arith.mulf %12, %22 : vector<32x128xf32>
    %c256 = arith.constant 256 : index
    %c0_17 = arith.constant 0 : index
    %24 = vector.load %arg4[%c256, %c0_17] : memref<464x128xf32, #tpu.memory_space<vmem>>, vector<32x16xf32>
    %c288 = arith.constant 288 : index
    %c0_18 = arith.constant 0 : index
    %25 = vector.load %arg4[%c288, %c0_18] : memref<464x128xf32, #tpu.memory_space<vmem>>, vector<32x16xf32>
    %c320 = arith.constant 320 : index
    %c0_19 = arith.constant 0 : index
    %26 = vector.load %arg4[%c320, %c0_19] : memref<464x128xf32, #tpu.memory_space<vmem>>, vector<32x32xf32>
    %c352 = arith.constant 352 : index
    %c0_20 = arith.constant 0 : index
    %27 = vector.load %arg4[%c352, %c0_20] : memref<464x128xf32, #tpu.memory_space<vmem>>, vector<32x1xf32>
    %cst_21 = arith.constant dense<0.000000e+00> : vector<32x128xf32>
    %28 = tpu.matmul %24, %0, %cst_21 {dimension_numbers = #tpu.dot_dimension_numbers<[1], [1], [0], [0], [0, 0, 1, 0], [], []>} : vector<32x16xf32>, vector<128x16xf32>, vector<32x128xf32> -> vector<32x128xf32>
    %cst_22 = arith.constant dense<0.000000e+00> : vector<32x128xf32>
    %29 = tpu.matmul %25, %1, %cst_22 {dimension_numbers = #tpu.dot_dimension_numbers<[1], [1], [0], [0], [0, 0, 1, 0], [], []>} : vector<32x16xf32>, vector<128x16xf32>, vector<32x128xf32> -> vector<32x128xf32>
    %30 = arith.addf %28, %29 : vector<32x128xf32>
    %cst_23 = arith.constant dense<0.000000e+00> : vector<32x128xf32>
    %31 = tpu.matmul %26, %23, %cst_23 {dimension_numbers = #tpu.dot_dimension_numbers<[1], [0], [0], [1], [0, 0, 1, 1], [], []>} : vector<32x32xf32>, vector<32x128xf32>, vector<32x128xf32> -> vector<32x128xf32>
    %32 = arith.addf %30, %31 : vector<32x128xf32>
    %33 = vector.broadcast %27 : vector<32x1xf32> to vector<32x128xf32>
    %34 = arith.addf %32, %33 : vector<32x128xf32>
    %cst_24 = arith.constant 0.000000e+00 : f32
    %35 = vector.broadcast %cst_24 : f32 to vector<32x128xf32>
    %36 = arith.maximumf %34, %35 : vector<32x128xf32>
    %c384 = arith.constant 384 : index
    %c0_25 = arith.constant 0 : index
    %37 = vector.load %arg4[%c384, %c0_25] : memref<464x128xf32, #tpu.memory_space<vmem>>, vector<32x32xf32>
    %c416 = arith.constant 416 : index
    %c0_26 = arith.constant 0 : index
    %38 = vector.load %arg4[%c416, %c0_26] : memref<464x128xf32, #tpu.memory_space<vmem>>, vector<32x1xf32>
    %cst_27 = arith.constant dense<0.000000e+00> : vector<32x128xf32>
    %39 = tpu.matmul %37, %36, %cst_27 {dimension_numbers = #tpu.dot_dimension_numbers<[1], [0], [0], [1], [0, 0, 1, 1], [], []>} : vector<32x32xf32>, vector<32x128xf32>, vector<32x128xf32> -> vector<32x128xf32>
    %40 = vector.broadcast %38 : vector<32x1xf32> to vector<32x128xf32>
    %41 = arith.addf %39, %40 : vector<32x128xf32>
    %cst_28 = arith.constant 0.000000e+00 : f32
    %42 = vector.broadcast %cst_28 : f32 to vector<32x128xf32>
    %43 = arith.maximumf %41, %42 : vector<32x128xf32>
    %c448 = arith.constant 448 : index
    %c0_29 = arith.constant 0 : index
    %44 = vector.load %arg4[%c448, %c0_29] : memref<464x128xf32, #tpu.memory_space<vmem>>, vector<8x32xf32>
    %c456 = arith.constant 456 : index
    %c0_30 = arith.constant 0 : index
    %45 = vector.load %arg4[%c456, %c0_30] : memref<464x128xf32, #tpu.memory_space<vmem>>, vector<8x1xf32>
    %cst_31 = arith.constant dense<0.000000e+00> : vector<8x128xf32>
    %46 = tpu.matmul %44, %43, %cst_31 {dimension_numbers = #tpu.dot_dimension_numbers<[1], [0], [0], [1], [0, 0, 1, 1], [], []>} : vector<8x32xf32>, vector<32x128xf32>, vector<8x128xf32> -> vector<8x128xf32>
    %47 = vector.broadcast %45 : vector<8x1xf32> to vector<8x128xf32>
    %48 = arith.addf %46, %47 : vector<8x128xf32>
    %49 = vector.extract_strided_slice %48 {offsets = [0, 0], sizes = [4, 128], strides = [1, 1]} : vector<8x128xf32> to vector<4x128xf32>
    %50 = vector.extract_strided_slice %48 {offsets = [4, 0], sizes = [4, 128], strides = [1, 1]} : vector<8x128xf32> to vector<4x128xf32>
    %51 = math.exp %50 : vector<4x128xf32>
    %52 = arith.mulf %51, %2 : vector<4x128xf32>
    %53 = arith.addf %49, %52 : vector<4x128xf32>
    %cst_32 = arith.constant 2.000000e+00 : f32
    %54 = vector.broadcast %cst_32 : f32 to vector<4x128xf32>
    %55 = arith.mulf %54, %53 : vector<4x128xf32>
    %56 = math.absf %55 : vector<4x128xf32>
    %cst_33 = arith.constant 0.000000e+00 : f32
    %57 = vector.broadcast %cst_33 : f32 to vector<4x128xf32>
    %58 = arith.subf %57, %56 : vector<4x128xf32>
    %59 = math.exp %58 : vector<4x128xf32>
    %cst_34 = arith.constant 0.000000e+00 : f32
    %60 = vector.broadcast %cst_34 : f32 to vector<4x128xf32>
    %61 = arith.cmpf oge, %53, %60 : vector<4x128xf32>
    %cst_35 = arith.constant 1.000000e+00 : f32
    %cst_36 = arith.constant -1.000000e+00 : f32
    %62 = vector.broadcast %cst_35 : f32 to vector<4x128xf32>
    %63 = vector.broadcast %cst_36 : f32 to vector<4x128xf32>
    %64 = arith.select %61, %62, %63 : vector<4x128xi1>, vector<4x128xf32>
    %cst_37 = arith.constant 1.000000e+00 : f32
    %65 = vector.broadcast %cst_37 : f32 to vector<4x128xf32>
    %66 = arith.subf %65, %59 : vector<4x128xf32>
    %67 = arith.mulf %64, %66 : vector<4x128xf32>
    %cst_38 = arith.constant 1.000000e+00 : f32
    %68 = vector.broadcast %cst_38 : f32 to vector<4x128xf32>
    %69 = arith.addf %68, %59 : vector<4x128xf32>
    %70 = arith.divf %67, %69 : vector<4x128xf32>
    %c0_39 = arith.constant 0 : index
    %c0_40 = arith.constant 0 : index
    %71 = vector.load %arg5[%c0_39, %c0_40] : memref<4x128xf32, #tpu.memory_space<vmem>>, vector<4x128xf32>
    tpu.vector_store %arg5[%c0_39, %c0_40], %70 {strides = array<i32>} : memref<4x128xf32, #tpu.memory_space<vmem>>, vector<4x128xf32>,
    %cst_41 = arith.constant -5.000000e-01 : f32
    %72 = vector.broadcast %cst_41 : f32 to vector<4x128xf32>
    %73 = arith.mulf %72, %2 : vector<4x128xf32>
    %74 = arith.mulf %73, %2 : vector<4x128xf32>
    %75 = arith.subf %74, %50 : vector<4x128xf32>
    %cst_42 = arith.constant 0.918938517 : f32
    %76 = vector.broadcast %cst_42 : f32 to vector<4x128xf32>
    %77 = arith.subf %75, %76 : vector<4x128xf32>
    %78 = arith.addf %77, %56 : vector<4x128xf32>
    %cst_43 = arith.constant 1.38629436 : f32
    %79 = vector.broadcast %cst_43 : f32 to vector<4x128xf32>
    %80 = arith.subf %78, %79 : vector<4x128xf32>
    %81 = math.log1p %59 : vector<4x128xf32>
    %cst_44 = arith.constant 2.000000e+00 : f32
    %82 = vector.broadcast %cst_44 : f32 to vector<4x128xf32>
    %83 = arith.mulf %82, %81 : vector<4x128xf32>
    %84 = arith.addf %80, %83 : vector<4x128xf32>
    %cst_45 = arith.constant dense<0.000000e+00> : vector<128xf32>
    %85 = vector.multi_reduction <add>, %84, %cst_45 [0] : vector<4x128xf32> to vector<128xf32>
    %86 = vector.shape_cast %85 : vector<128xf32> to vector<1x128xf32>
    %c0_46 = arith.constant 0 : index
    %c0_47 = arith.constant 0 : index
    %87 = vector.load %arg6[%c0_46, %c0_47] : memref<1x128xf32, #tpu.memory_space<vmem>>, vector<1x128xf32>
    tpu.vector_store %arg6[%c0_46, %c0_47], %86 {strides = array<i32>} : memref<1x128xf32, #tpu.memory_space<vmem>>, vector<1x128xf32>,
    return
  }
  func.func @transform_0(%arg0: i32) -> (i32, i32) {
    %c0_i32 = arith.constant 0 : i32
    %c0_i32_0 = arith.constant 0 : i32
    return %arg0, %c0_i32 : i32, i32
  }
  func.func @transform_1(%arg0: i32) -> (i32, i32) {
    %c0_i32 = arith.constant 0 : i32
    %c0_i32_0 = arith.constant 0 : i32
    return %arg0, %c0_i32 : i32, i32
  }
  func.func @transform_2(%arg0: i32) -> (i32, i32) {
    %c0_i32 = arith.constant 0 : i32
    %c0_i32_0 = arith.constant 0 : i32
    return %c0_i32, %arg0 : i32, i32
  }
  func.func @transform_3(%arg0: i32) -> (i32, i32) {
    %c0_i32 = arith.constant 0 : i32
    %c0_i32_0 = arith.constant 0 : i32
    %c0_i32_1 = arith.constant 0 : i32
    return %c0_i32, %c0_i32_0 : i32, i32
  }
  func.func @transform_4(%arg0: i32) -> (i32, i32) {
    %c0_i32 = arith.constant 0 : i32
    %c0_i32_0 = arith.constant 0 : i32
    return %c0_i32, %arg0 : i32, i32
  }
  func.func @transform_5(%arg0: i32) -> (i32, i32) {
    %c0_i32 = arith.constant 0 : i32
    %c0_i32_0 = arith.constant 0 : i32
    return %c0_i32, %arg0 : i32, i32
  }
}

</mosaic_0001>

<llo_original>
// kernel: tpu_custom_call.1
$region0: #{tpu_custom_call.1}
  #allocation0 [shape = 'u32[]', space=smem, size = 0x4, offset = 0x4, fixed_abs, tag = 'smem constant byte address 0x4 - core index']
  #allocation1 [shape = 'u32[72,128]{1,0:T(1,128)}', space=vmem, size = 0x9000, scoped, tag = 'internal scratch']
  %s0 = inlined_call_operand.vmem [shape: f32[128,16], index: 0, kind: input, shape index: {}]
  %s1 = inlined_call_operand.vmem [shape: f32[128,16], index: 1, kind: input, shape index: {}]
  %s2 = inlined_call_operand.vmem [shape: f32[4,128], index: 2, kind: input, shape index: {}]
  %s3 = inlined_call_operand.hbm [shape: f32[464,128], index: 3, kind: input, shape index: {}]
  %s4 = inlined_call_operand.hbm [shape: f32[4,128], index: 4, kind: output, shape index: {0}]
  %s5 = inlined_call_operand.hbm [shape: f32[1,128], index: 5, kind: output, shape index: {1}]
  %6 = xla_tuple %s4, %s5
  %s7 = sld [smem:[#allocation0]]
  $region38: #{tpu_custom_call.1} parent=0
    _
  %s9 = ssub.s32 1, %s7
  %s10 = scalar_select 0, %s9, %s7
  $region1: #{tpu_custom_call.1} parent=0
    #allocation2 [shape = 'u8[237568]{0}', space=vmem, size = 0x3a000, scoped, tag = 'input window, operand 3, single buffered']
    #allocation3 [shape = 's32[1]{0}', space=sflag, size = 0x4, scoped, tag = 'scoped memory for tpu_custom_call.1']
    #allocation4 [shape = 's32[1]{0}', space=sflag, size = 0x4, scoped, tag = 'scoped memory for tpu_custom_call.1']
    #allocation5 [shape = 'u8[2048]{0}', space=vmem, size = 0x800, scoped, tag = 'output window, operand 0, single buffered']
    #allocation6 [shape = 'u8[512]{0}', space=vmem, size = 0x400, scoped, tag = 'output window, operand 1, single buffered']
    #allocation7 [shape = 's32[1]{0}', space=sflag, size = 0x4, scoped, tag = 'scoped memory for tpu_custom_call.1']
    %11 = vsyncpa [#allocation3], 0
    %12 = vsyncpa [#allocation4], 0
    %13 = vsyncpa [#allocation7], 0
    // Predicated region
    $region2: #{tpu_custom_call.1} parent=1 // pred_check
      _
    $region3: #{tpu_custom_call.1} parent=1 // pred_check_branch
      %15 = sbr.rel (0) target = $region5
    $region4: #{tpu_custom_call.1} parent=1 // pred_region
      _
    $region5: #{tpu_custom_call.1} parent=1 // pred_fallthru
      _
    // Predicated region
    $region6: #{tpu_custom_call.1} parent=1 // pred_check
      _
    $region7: #{tpu_custom_call.1} parent=1 // pred_check_branch
      %17 = sbr.rel (0) target = $region9
    $region8: #{tpu_custom_call.1} parent=1 // pred_region
      _
    $region9: #{tpu_custom_call.1} parent=1 // pred_fallthru
      _
    // Predicated region
    $region10: #{tpu_custom_call.1} parent=1 // pred_check
      _
    $region11: #{tpu_custom_call.1} parent=1 // pred_check_branch
      %19 = sbr.rel (0) target = $region13
    $region12: #{tpu_custom_call.1} parent=1 // pred_region
      _
    $region13: #{tpu_custom_call.1} parent=1 // pred_fallthru
      _
    // Predicated region
    $region14: #{tpu_custom_call.1} parent=1 // pred_check
      _
    $region15: #{tpu_custom_call.1} parent=1 // pred_check_branch
      %21 = sbr.rel (0) target = $region17
    $region16: #{tpu_custom_call.1} parent=1 // pred_region
      %23 = vsyncadd [#allocation3], 0
      %s24 = sshll.u32 %s3, 4
      %s25 = int_to_ptr.hbm [resolvable:$true] %s24
      %s26 = sshll.u32 [#allocation2], 4
      %s27 = int_to_ptr.vmem [resolvable:$true] %s26
      %32 = dma.hbm_to_vmem [thread:$0]  %s25, 7424, %s27, [#allocation3], 128, 128, 8
    $region17: #{tpu_custom_call.1} parent=1 // pred_fallthru
      _
    // Predicated region
    $region18: #{tpu_custom_call.1} parent=1 // pred_check
      _
    $region19: #{tpu_custom_call.1} parent=1 // pred_check_branch
      %34 = sbr.rel (0) target = $region21
    $region20: #{tpu_custom_call.1} parent=1 // pred_region
      %36 = dma.done [#allocation3], 7424
    $region21: #{tpu_custom_call.1} parent=1 // pred_fallthru
      _
    %v37 = vld [vmem:[%s0] sm:$0xff]
    %v38 = vld [vmem:[%s0 + $0x8] sm:$0xff]
    %v39 = vld [vmem:[%s0 + $0x10] sm:$0xff]
    %v40 = vld [vmem:[%s0 + $0x18] sm:$0xff]
    %v41 = vld [vmem:[%s0 + $0x20] sm:$0xff]
    %v42 = vld [vmem:[%s0 + $0x28] sm:$0xff]
    %v43 = vld [vmem:[%s0 + $0x30] sm:$0xff]
    %v44 = vld [vmem:[%s0 + $0x38] sm:$0xff]
    %v45 = vld [vmem:[%s0 + $0x40] sm:$0xff]
    %v46 = vld [vmem:[%s0 + $0x48] sm:$0xff]
    %v47 = vld [vmem:[%s0 + $0x50] sm:$0xff]
    %v48 = vld [vmem:[%s0 + $0x58] sm:$0xff]
    %v49 = vld [vmem:[%s0 + $0x60] sm:$0xff]
    %v50 = vld [vmem:[%s0 + $0x68] sm:$0xff]
    %v51 = vld [vmem:[%s0 + $0x70] sm:$0xff]
    %v52 = vld [vmem:[%s0 + $0x78] sm:$0xff]
    %v53 = vld [vmem:[%s1] sm:$0xff]
    %v54 = vld [vmem:[%s1 + $0x8] sm:$0xff]
    %v55 = vld [vmem:[%s1 + $0x10] sm:$0xff]
    %v56 = vld [vmem:[%s1 + $0x18] sm:$0xff]
    %v57 = vld [vmem:[%s1 + $0x20] sm:$0xff]
    %v58 = vld [vmem:[%s1 + $0x28] sm:$0xff]
    %v59 = vld [vmem:[%s1 + $0x30] sm:$0xff]
    %v60 = vld [vmem:[%s1 + $0x38] sm:$0xff]
    %v61 = vld [vmem:[%s1 + $0x40] sm:$0xff]
    %v62 = vld [vmem:[%s1 + $0x48] sm:$0xff]
    %v63 = vld [vmem:[%s1 + $0x50] sm:$0xff]
    %v64 = vld [vmem:[%s1 + $0x58] sm:$0xff]
    %v65 = vld [vmem:[%s1 + $0x60] sm:$0xff]
    %v66 = vld [vmem:[%s1 + $0x68] sm:$0xff]
    %v67 = vld [vmem:[%s1 + $0x70] sm:$0xff]
    %v68 = vld [vmem:[%s1 + $0x78] sm:$0xff]
    %v69 = vld [vmem:[%s2] sm:$0xf]
    %v70 = vld [vmem:[#allocation2] sm:$0xff]
    %v71 = vld [vmem:[#allocation2 + $0x8] sm:$0xff]
    %v72 = vld [vmem:[#allocation2 + $0x10] sm:$0xff]
    %v73 = vld [vmem:[#allocation2 + $0x18] sm:$0xff]
    %v74 = vld [vmem:[#allocation2 + $0x20] sm:$0xff]
    %v75 = vld [vmem:[#allocation2 + $0x28] sm:$0xff]
    %v76 = vld [vmem:[#allocation2 + $0x30] sm:$0xff]
    %v77 = vld [vmem:[#allocation2 + $0x38] sm:$0xff]
    %79 = vset.pattern.permute.xlu0 0
    %80 = vperm.xlu0 %79, %v74
    %v81 = vpop.permute.xlu0 %80
    %84 = vset.pattern.permute.xlu0 0
    %85 = vperm.xlu0 %84, %v75
    %v86 = vpop.permute.xlu0 %85
    %89 = vset.pattern.permute.xlu0 0
    %90 = vperm.xlu0 %89, %v76
    %v91 = vpop.permute.xlu0 %90
    %94 = vset.pattern.permute.xlu0 0
    %95 = vperm.xlu0 %94, %v77
    %v96 = vpop.permute.xlu0 %95
    %vm98 = vcmask 130048
    %v100 = vsel %vm98, %v70, 0
    %v103 = vsel %vm98, %v71, 0
    %v106 = vsel %vm98, %v72, 0
    %v109 = vsel %vm98, %v73, 0
    %v112 = vsel %vm98, %v37, 0
    %v115 = vsel %vm98, %v38, 0
    %v118 = vsel %vm98, %v39, 0
    %v121 = vsel %vm98, %v40, 0
    %v124 = vsel %vm98, %v41, 0
    %v127 = vsel %vm98, %v42, 0
    %v130 = vsel %vm98, %v43, 0
    %v133 = vsel %vm98, %v44, 0
    %v136 = vsel %vm98, %v45, 0
    %v139 = vsel %vm98, %v46, 0
    %v142 = vsel %vm98, %v47, 0
    %v145 = vsel %vm98, %v48, 0
    %v148 = vsel %vm98, %v49, 0
    %v151 = vsel %vm98, %v50, 0
    %v154 = vsel %vm98, %v51, 0
    %v157 = vsel %vm98, %v52, 0
    %159 = vmatpush.xpose.msra.mxu0 %v157
    %160 = vmatpush.xpose.msra.mxu0 %v154
    %161 = vmatpush.xpose.msra.mxu0 %v151
    %162 = vmatpush.xpose.msra.mxu0 %v148
    %163 = vmatpush.xpose.msra.mxu0 %v145
    %164 = vmatpush.xpose.msra.mxu0 %v142
    %165 = vmatpush.xpose.msra.mxu0 %v139
    %166 = vmatpush.xpose.msra.mxu0 %v136
    %167 = vmatpush.xpose.msra.mxu0 %v133
    %168 = vmatpush.xpose.msra.mxu0 %v130
    %169 = vmatpush.xpose.msra.mxu0 %v127
    %170 = vmatpush.xpose.msra.mxu0 %v124
    %171 = vmatpush.xpose.msra.mxu0 %v121
    %172 = vmatpush.xpose.msra.mxu0 %v118
    %173 = vmatpush.xpose.msra.mxu0 %v115
    %174 = vmatpush.xpose.msra.mxu0 %v112
    %175 = vmatmul.f32.gmra.mxu0 %v100
    %v176 = vpop.f32.mrf.mxu0
    %v177 = vadd.f32 %v81, %v176
    %178 = vmatmul.f32.gmra.mxu0 %v103
    %v179 = vpop.f32.mrf.mxu0
    %v180 = vadd.f32 %v86, %v179
    %181 = vmatmul.f32.gmra.mxu0 %v106
    %v182 = vpop.f32.mrf.mxu0
    %v183 = vadd.f32 %v91, %v182
    %184 = vmatmul.f32.gmra.mxu0 %v109
    %v185 = vpop.f32.mrf.mxu0
    %v186 = vadd.f32 %v96, %v185
    %187 = vdwg.mxu0
    %v188 = vld [vmem:[#allocation2 + $0x40] sm:$0xff]
    %v189 = vld [vmem:[#allocation2 + $0x48] sm:$0xff]
    %v190 = vld [vmem:[#allocation2 + $0x50] sm:$0xff]
    %v191 = vld [vmem:[#allocation2 + $0x58] sm:$0xff]
    %v192 = vld [vmem:[#allocation2 + $0x60] sm:$0xff]
    %v193 = vld [vmem:[#allocation2 + $0x68] sm:$0xff]
    %v194 = vld [vmem:[#allocation2 + $0x70] sm:$0xff]
    %v195 = vld [vmem:[#allocation2 + $0x78] sm:$0xff]
    %197 = vset.pattern.permute.xlu0 0
    %198 = vperm.xlu0 %197, %v192
    %v199 = vpop.permute.xlu0 %198
    %202 = vset.pattern.permute.xlu0 0
    %203 = vperm.xlu0 %202, %v193
    %v204 = vpop.permute.xlu0 %203
    %207 = vset.pattern.permute.xlu0 0
    %208 = vperm.xlu0 %207, %v194
    %v209 = vpop.permute.xlu0 %208
    %212 = vset.pattern.permute.xlu0 0
    %213 = vperm.xlu0 %212, %v195
    %v214 = vpop.permute.xlu0 %213
    %vm216 = vcmask 261120
    %v218 = vsel %vm216, %v188, 0
    %v221 = vsel %vm216, %v189, 0
    %v224 = vsel %vm216, %v190, 0
    %v227 = vsel %vm216, %v191, 0
    %229 = vmatpush.msra.mxu0 0.0
    %230 = vmatpush.msra.mxu0 0.0
    %231 = vmatpush.msra.mxu0 0.0
    %232 = vmatpush.msra.mxu0 0.0
    %233 = vmatpush.msra.mxu0 0.0
    %234 = vmatpush.msra.mxu0 0.0
    %235 = vmatpush.msra.mxu0 0.0
    %236 = vmatpush.msra.mxu0 0.0
    %237 = vmatpush.msra.mxu0 0.0
    %238 = vmatpush.msra.mxu0 0.0
    %239 = vmatpush.msra.mxu0 0.0
    %240 = vmatpush.msra.mxu0 0.0
    %241 = vmatpush.msra.mxu0 %v186
    %242 = vmatpush.msra.mxu0 %v183
    %243 = vmatpush.msra.mxu0 %v180
    %244 = vmatpush.msra.mxu0 %v177
    %245 = vmatmul.f32.gmra.mxu0 %v218
    %v246 = vpop.f32.mrf.mxu0
    %v247 = vadd.f32 %v199, %v246
    %248 = vmatmul.f32.gmra.mxu0 %v221
    %v249 = vpop.f32.mrf.mxu0
    %v250 = vadd.f32 %v204, %v249
    %251 = vmatmul.f32.gmra.mxu0 %v224
    %v252 = vpop.f32.mrf.mxu0
    %v253 = vadd.f32 %v209, %v252
    %254 = vmatmul.f32.gmra.mxu0 %v227
    %v255 = vpop.f32.mrf.mxu0
    %v256 = vadd.f32 %v214, %v255
    %257 = vdwg.mxu0
    %v258 = vld [vmem:[#allocation2 + $0x80] sm:$0xff]
    %v259 = vld [vmem:[#allocation2 + $0x88] sm:$0xff]
    %v260 = vld [vmem:[#allocation2 + $0x90] sm:$0xff]
    %v261 = vld [vmem:[#allocation2 + $0x98] sm:$0xff]
    %v262 = vld [vmem:[#allocation2 + $0xa0] sm:$0xff]
    %v263 = vld [vmem:[#allocation2 + $0xa8] sm:$0xff]
    %v264 = vld [vmem:[#allocation2 + $0xb0] sm:$0xff]
    %v265 = vld [vmem:[#allocation2 + $0xb8] sm:$0xff]
    %267 = vset.pattern.permute.xlu0 0
    %268 = vperm.xlu0 %267, %v262
    %v269 = vpop.permute.xlu0 %268
    %272 = vset.pattern.permute.xlu0 0
    %273 = vperm.xlu0 %272, %v263
    %v274 = vpop.permute.xlu0 %273
    %277 = vset.pattern.permute.xlu0 0
    %278 = vperm.xlu0 %277, %v264
    %v279 = vpop.permute.xlu0 %278
    %282 = vset.pattern.permute.xlu0 0
    %283 = vperm.xlu0 %282, %v265
    %v284 = vpop.permute.xlu0 %283
    %v287 = vsel %vm98, %v258, 0
    %v290 = vsel %vm98, %v259, 0
    %v293 = vsel %vm98, %v260, 0
    %v296 = vsel %vm98, %v261, 0
    %v299 = vsel %vm98, %v53, 0
    %v302 = vsel %vm98, %v54, 0
    %v305 = vsel %vm98, %v55, 0
    %v308 = vsel %vm98, %v56, 0
    %v311 = vsel %vm98, %v57, 0
    %v314 = vsel %vm98, %v58, 0
    %v317 = vsel %vm98, %v59, 0
    %v320 = vsel %vm98, %v60, 0
    %v323 = vsel %vm98, %v61, 0
    %v326 = vsel %vm98, %v62, 0
    %v329 = vsel %vm98, %v63, 0
    %v332 = vsel %vm98, %v64, 0
    %v335 = vsel %vm98, %v65, 0
    %v338 = vsel %vm98, %v66, 0
    %v341 = vsel %vm98, %v67, 0
    %v344 = vsel %vm98, %v68, 0
    %346 = vmatpush.xpose.msra.mxu0 %v344
    %347 = vmatpush.xpose.msra.mxu0 %v341
    %348 = vmatpush.xpose.msra.mxu0 %v338
    %349 = vmatpush.xpose.msra.mxu0 %v335
    %350 = vmatpush.xpose.msra.mxu0 %v332
    %351 = vmatpush.xpose.msra.mxu0 %v329
    %352 = vmatpush.xpose.msra.mxu0 %v326
    %353 = vmatpush.xpose.msra.mxu0 %v323
    %354 = vmatpush.xpose.msra.mxu0 %v320
    %355 = vmatpush.xpose.msra.mxu0 %v317
    %356 = vmatpush.xpose.msra.mxu0 %v314
    %357 = vmatpush.xpose.msra.mxu0 %v311
    %358 = vmatpush.xpose.msra.mxu0 %v308
    %359 = vmatpush.xpose.msra.mxu0 %v305
    %360 = vmatpush.xpose.msra.mxu0 %v302
    %361 = vmatpush.xpose.msra.mxu0 %v299
    %362 = vmatmul.f32.gmra.mxu0 %v287
    %v363 = vpop.f32.mrf.mxu0
    %v364 = vadd.f32 %v269, %v363
    %365 = vmatmul.f32.gmra.mxu0 %v290
    %v366 = vpop.f32.mrf.mxu0
    %v367 = vadd.f32 %v274, %v366
    %368 = vmatmul.f32.gmra.mxu0 %v293
    %v369 = vpop.f32.mrf.mxu0
    %v370 = vadd.f32 %v279, %v369
    %371 = vmatmul.f32.gmra.mxu0 %v296
    %v372 = vpop.f32.mrf.mxu0
    %v373 = vadd.f32 %v284, %v372
    %374 = vdwg.mxu0
    %v375 = vld [vmem:[#allocation2 + $0xc0] sm:$0xff]
    %v376 = vld [vmem:[#allocation2 + $0xc8] sm:$0xff]
    %v377 = vld [vmem:[#allocation2 + $0xd0] sm:$0xff]
    %v378 = vld [vmem:[#allocation2 + $0xd8] sm:$0xff]
    %v379 = vld [vmem:[#allocation2 + $0xe0] sm:$0xff]
    %v380 = vld [vmem:[#allocation2 + $0xe8] sm:$0xff]
    %v381 = vld [vmem:[#allocation2 + $0xf0] sm:$0xff]
    %v382 = vld [vmem:[#allocation2 + $0xf8] sm:$0xff]
    %384 = vset.pattern.permute.xlu0 0
    %385 = vperm.xlu0 %384, %v379
    %v386 = vpop.permute.xlu0 %385
    %389 = vset.pattern.permute.xlu0 0
    %390 = vperm.xlu0 %389, %v380
    %v391 = vpop.permute.xlu0 %390
    %394 = vset.pattern.permute.xlu0 0
    %395 = vperm.xlu0 %394, %v381
    %v396 = vpop.permute.xlu0 %395
    %399 = vset.pattern.permute.xlu0 0
    %400 = vperm.xlu0 %399, %v382
    %v401 = vpop.permute.xlu0 %400
    %v404 = vsel %vm216, %v375, 0
    %v407 = vsel %vm216, %v376, 0
    %v410 = vsel %vm216, %v377, 0
    %v413 = vsel %vm216, %v378, 0
    %415 = vmatpush.msra.mxu0 0.0
    %416 = vmatpush.msra.mxu0 0.0
    %417 = vmatpush.msra.mxu0 0.0
    %418 = vmatpush.msra.mxu0 0.0
    %419 = vmatpush.msra.mxu0 0.0
    %420 = vmatpush.msra.mxu0 0.0
    %421 = vmatpush.msra.mxu0 0.0
    %422 = vmatpush.msra.mxu0 0.0
    %423 = vmatpush.msra.mxu0 0.0
    %424 = vmatpush.msra.mxu0 0.0
    %425 = vmatpush.msra.mxu0 0.0
    %426 = vmatpush.msra.mxu0 0.0
    %427 = vmatpush.msra.mxu0 %v373
    %428 = vmatpush.msra.mxu0 %v370
    %429 = vmatpush.msra.mxu0 %v367
    %430 = vmatpush.msra.mxu0 %v364
    %431 = vmatmul.f32.gmra.mxu0 %v404
    %v432 = vpop.f32.mrf.mxu0
    %v433 = vadd.f32 %v386, %v432
    %434 = vmatmul.f32.gmra.mxu0 %v407
    %v435 = vpop.f32.mrf.mxu0
    %v436 = vadd.f32 %v391, %v435
    %437 = vmatmul.f32.gmra.mxu0 %v410
    %v438 = vpop.f32.mrf.mxu0
    %v439 = vadd.f32 %v396, %v438
    %440 = vmatmul.f32.gmra.mxu0 %v413
    %v441 = vpop.f32.mrf.mxu0
    %v442 = vadd.f32 %v401, %v441
    %443 = vdwg.mxu0
    %v444 = vmul.f32 %v247, %v433
    %v445 = vmul.f32 %v250, %v436
    %v446 = vmul.f32 %v253, %v439
    %v447 = vmul.f32 %v256, %v442
    %v448 = vld [vmem:[#allocation2 + $0x100] sm:$0xff]
    %v449 = vld [vmem:[#allocation2 + $0x108] sm:$0xff]
    %v450 = vld [vmem:[#allocation2 + $0x110] sm:$0xff]
    %v451 = vld [vmem:[#allocation2 + $0x118] sm:$0xff]
    %v452 = vld [vmem:[#allocation2 + $0x120] sm:$0xff]
    %v453 = vld [vmem:[#allocation2 + $0x128] sm:$0xff]
    %v454 = vld [vmem:[#allocation2 + $0x130] sm:$0xff]
    %v455 = vld [vmem:[#allocation2 + $0x138] sm:$0xff]
    %v456 = vld [vmem:[#allocation2 + $0x140] sm:$0xff]
    %v457 = vld [vmem:[#allocation2 + $0x148] sm:$0xff]
    %v458 = vld [vmem:[#allocation2 + $0x150] sm:$0xff]
    %v459 = vld [vmem:[#allocation2 + $0x158] sm:$0xff]
    %v460 = vld [vmem:[#allocation2 + $0x160] sm:$0xff]
    %v461 = vld [vmem:[#allocation2 + $0x168] sm:$0xff]
    %v462 = vld [vmem:[#allocation2 + $0x170] sm:$0xff]
    %v463 = vld [vmem:[#allocation2 + $0x178] sm:$0xff]
    %v465 = vsel %vm98, %v452, 0
    %v468 = vsel %vm98, %v453, 0
    %v471 = vsel %vm98, %v454, 0
    %v474 = vsel %vm98, %v455, 0
    %476 = vmatpush.xpose.msra.mxu0 %v344
    %477 = vmatpush.xpose.msra.mxu0 %v341
    %478 = vmatpush.xpose.msra.mxu0 %v338
    %479 = vmatpush.xpose.msra.mxu0 %v335
    %480 = vmatpush.xpose.msra.mxu0 %v332
    %481 = vmatpush.xpose.msra.mxu0 %v329
    %482 = vmatpush.xpose.msra.mxu0 %v326
    %483 = vmatpush.xpose.msra.mxu0 %v323
    %484 = vmatpush.xpose.msra.mxu0 %v320
    %485 = vmatpush.xpose.msra.mxu0 %v317
    %486 = vmatpush.xpose.msra.mxu0 %v314
    %487 = vmatpush.xpose.msra.mxu0 %v311
    %488 = vmatpush.xpose.msra.mxu0 %v308
    %489 = vmatpush.xpose.msra.mxu0 %v305
    %490 = vmatpush.xpose.msra.mxu0 %v302
    %491 = vmatpush.xpose.msra.mxu0 %v299
    %492 = vmatmul.f32.gmra.mxu0 %v465
    %v493 = vpop.f32.mrf.mxu0
    %v494 = vadd.f32 0.0, %v493
    %495 = vmatmul.f32.gmra.mxu0 %v468
    %v496 = vpop.f32.mrf.mxu0
    %v497 = vadd.f32 0.0, %v496
    %498 = vmatmul.f32.gmra.mxu0 %v471
    %v499 = vpop.f32.mrf.mxu0
    %v500 = vadd.f32 0.0, %v499
    %501 = vmatmul.f32.gmra.mxu0 %v474
    %v502 = vpop.f32.mrf.mxu0
    %v503 = vadd.f32 0.0, %v502
    %504 = vdwg.mxu0
    %v506 = vsel %vm98, %v448, 0
    %v509 = vsel %vm98, %v449, 0
    %v512 = vsel %vm98, %v450, 0
    %v515 = vsel %vm98, %v451, 0
    %517 = vmatpush.xpose.msra.mxu0 %v157
    %518 = vmatpush.xpose.msra.mxu0 %v154
    %519 = vmatpush.xpose.msra.mxu0 %v151
    %520 = vmatpush.xpose.msra.mxu0 %v148
    %521 = vmatpush.xpose.msra.mxu0 %v145
    %522 = vmatpush.xpose.msra.mxu0 %v142
    %523 = vmatpush.xpose.msra.mxu0 %v139
    %524 = vmatpush.xpose.msra.mxu0 %v136
    %525 = vmatpush.xpose.msra.mxu0 %v133
    %526 = vmatpush.xpose.msra.mxu0 %v130
    %527 = vmatpush.xpose.msra.mxu0 %v127
    %528 = vmatpush.xpose.msra.mxu0 %v124
    %529 = vmatpush.xpose.msra.mxu0 %v121
    %530 = vmatpush.xpose.msra.mxu0 %v118
    %531 = vmatpush.xpose.msra.mxu0 %v115
    %532 = vmatpush.xpose.msra.mxu0 %v112
    %533 = vmatmul.f32.gmra.mxu0 %v506
    %v534 = vpop.f32.mrf.mxu0
    %v535 = vadd.f32 %v494, %v534
    %536 = vmatmul.f32.gmra.mxu0 %v509
    %v537 = vpop.f32.mrf.mxu0
    %v538 = vadd.f32 %v497, %v537
    %539 = vmatmul.f32.gmra.mxu0 %v512
    %v540 = vpop.f32.mrf.mxu0
    %v541 = vadd.f32 %v500, %v540
    %542 = vmatmul.f32.gmra.mxu0 %v515
    %v543 = vpop.f32.mrf.mxu0
    %v544 = vadd.f32 %v503, %v543
    %545 = vdwg.mxu0
    %v547 = vsel %vm216, %v456, 0
    %v550 = vsel %vm216, %v457, 0
    %v553 = vsel %vm216, %v458, 0
    %v556 = vsel %vm216, %v459, 0
    %558 = vmatpush.msra.mxu0 0.0
    %559 = vmatpush.msra.mxu0 0.0
    %560 = vmatpush.msra.mxu0 0.0
    %561 = vmatpush.msra.mxu0 0.0
    %562 = vmatpush.msra.mxu0 0.0
    %563 = vmatpush.msra.mxu0 0.0
    %564 = vmatpush.msra.mxu0 0.0
    %565 = vmatpush.msra.mxu0 0.0
    %566 = vmatpush.msra.mxu0 0.0
    %567 = vmatpush.msra.mxu0 0.0
    %568 = vmatpush.msra.mxu0 0.0
    %569 = vmatpush.msra.mxu0 0.0
    %570 = vmatpush.msra.mxu0 %v447
    %571 = vmatpush.msra.mxu0 %v446
    %572 = vmatpush.msra.mxu0 %v445
    %573 = vmatpush.msra.mxu0 %v444
    %574 = vmatmul.f32.gmra.mxu0 %v547
    %v575 = vpop.f32.mrf.mxu0
    %v576 = vadd.f32 0.0, %v575
    %577 = vmatmul.f32.gmra.mxu0 %v550
    %v578 = vpop.f32.mrf.mxu0
    %v579 = vadd.f32 0.0, %v578
    %580 = vmatmul.f32.gmra.mxu0 %v553
    %v581 = vpop.f32.mrf.mxu0
    %v582 = vadd.f32 0.0, %v581
    %583 = vmatmul.f32.gmra.mxu0 %v556
    %v584 = vpop.f32.mrf.mxu0
    %v585 = vadd.f32 0.0, %v584
    %586 = vdwg.mxu0
    %v587 = vadd.f32 %v535, %v576
    %v588 = vadd.f32 %v538, %v579
    %v589 = vadd.f32 %v541, %v582
    %v590 = vadd.f32 %v544, %v585
    %592 = vset.pattern.permute.xlu0 0
    %593 = vperm.xlu0 %592, %v460
    %v594 = vpop.permute.xlu0 %593
    %597 = vset.pattern.permute.xlu0 0
    %598 = vperm.xlu0 %597, %v461
    %v599 = vpop.permute.xlu0 %598
    %602 = vset.pattern.permute.xlu0 0
    %603 = vperm.xlu0 %602, %v462
    %v604 = vpop.permute.xlu0 %603
    %607 = vset.pattern.permute.xlu0 0
    %608 = vperm.xlu0 %607, %v463
    %v609 = vpop.permute.xlu0 %608
    %v611 = vadd.f32 %v587, %v594
    %v612 = vadd.f32 %v588, %v599
    %v613 = vadd.f32 %v589, %v604
    %v614 = vadd.f32 %v590, %v609
    %v615 = vmax.f32 %v611, 0.0
    %v616 = vmax.f32 %v612, 0.0
    %v617 = vmax.f32 %v613, 0.0
    %v618 = vmax.f32 %v614, 0.0
    %v619 = vld [vmem:[#allocation2 + $0x180] sm:$0xff]
    %v620 = vld [vmem:[#allocation2 + $0x188] sm:$0xff]
    %v621 = vld [vmem:[#allocation2 + $0x190] sm:$0xff]
    %v622 = vld [vmem:[#allocation2 + $0x198] sm:$0xff]
    %v623 = vld [vmem:[#allocation2 + $0x1a0] sm:$0xff]
    %v624 = vld [vmem:[#allocation2 + $0x1a8] sm:$0xff]
    %v625 = vld [vmem:[#allocation2 + $0x1b0] sm:$0xff]
    %v626 = vld [vmem:[#allocation2 + $0x1b8] sm:$0xff]
    %628 = vset.pattern.permute.xlu0 0
    %629 = vperm.xlu0 %628, %v623
    %v630 = vpop.permute.xlu0 %629
    %633 = vset.pattern.permute.xlu0 0
    %634 = vperm.xlu0 %633, %v624
    %v635 = vpop.permute.xlu0 %634
    %638 = vset.pattern.permute.xlu0 0
    %639 = vperm.xlu0 %638, %v625
    %v640 = vpop.permute.xlu0 %639
    %643 = vset.pattern.permute.xlu0 0
    %644 = vperm.xlu0 %643, %v626
    %v645 = vpop.permute.xlu0 %644
    %v648 = vsel %vm216, %v619, 0
    %v651 = vsel %vm216, %v620, 0
    %v654 = vsel %vm216, %v621, 0
    %v657 = vsel %vm216, %v622, 0
    %659 = vmatpush.msra.mxu0 0.0
    %660 = vmatpush.msra.mxu0 0.0
    %661 = vmatpush.msra.mxu0 0.0
    %662 = vmatpush.msra.mxu0 0.0
    %663 = vmatpush.msra.mxu0 0.0
    %664 = vmatpush.msra.mxu0 0.0
    %665 = vmatpush.msra.mxu0 0.0
    %666 = vmatpush.msra.mxu0 0.0
    %667 = vmatpush.msra.mxu0 0.0
    %668 = vmatpush.msra.mxu0 0.0
    %669 = vmatpush.msra.mxu0 0.0
    %670 = vmatpush.msra.mxu0 0.0
    %671 = vmatpush.msra.mxu0 %v618
    %672 = vmatpush.msra.mxu0 %v617
    %673 = vmatpush.msra.mxu0 %v616
    %674 = vmatpush.msra.mxu0 %v615
    %675 = vmatmul.f32.gmra.mxu0 %v648
    %v676 = vpop.f32.mrf.mxu0
    %v677 = vadd.f32 %v630, %v676
    %678 = vmatmul.f32.gmra.mxu0 %v651
    %v679 = vpop.f32.mrf.mxu0
    %v680 = vadd.f32 %v635, %v679
    %681 = vmatmul.f32.gmra.mxu0 %v654
    %v682 = vpop.f32.mrf.mxu0
    %v683 = vadd.f32 %v640, %v682
    %684 = vmatmul.f32.gmra.mxu0 %v657
    %v685 = vpop.f32.mrf.mxu0
    %v686 = vadd.f32 %v645, %v685
    %687 = vdwg.mxu0
    %v688 = vmax.f32 %v677, 0.0
    %v689 = vmax.f32 %v680, 0.0
    %v690 = vmax.f32 %v683, 0.0
    %v691 = vmax.f32 %v686, 0.0
    %v692 = vld [vmem:[#allocation2 + $0x1c0] sm:$0xff]
    %v693 = vld [vmem:[#allocation2 + $0x1c8] sm:$0xff]
    %695 = vset.pattern.permute.xlu0 0
    %696 = vperm.xlu0 %695, %v693
    %v697 = vpop.permute.xlu0 %696
    %v700 = vsel %vm216, %v692, 0
    %702 = vmatpush.msra.mxu0 0.0
    %703 = vmatpush.msra.mxu0 0.0
    %704 = vmatpush.msra.mxu0 0.0
    %705 = vmatpush.msra.mxu0 0.0
    %706 = vmatpush.msra.mxu0 0.0
    %707 = vmatpush.msra.mxu0 0.0
    %708 = vmatpush.msra.mxu0 0.0
    %709 = vmatpush.msra.mxu0 0.0
    %710 = vmatpush.msra.mxu0 0.0
    %711 = vmatpush.msra.mxu0 0.0
    %712 = vmatpush.msra.mxu0 0.0
    %713 = vmatpush.msra.mxu0 0.0
    %714 = vmatpush.msra.mxu0 %v691
    %715 = vmatpush.msra.mxu0 %v690
    %716 = vmatpush.msra.mxu0 %v689
    %717 = vmatpush.msra.mxu0 %v688
    %718 = vmatmul.f32.gmra.mxu0 %v700
    %v719 = vpop.f32.mrf.mxu0
    %v720 = vadd.f32 %v697, %v719
    %721 = vdwg.mxu0
    %v722 = vmul.f32 %v720, 1.442695
    %v723 = vpow.pop %v722
    %v725 = vrot.slane %v69, 4
    %v727 = vmul.f32 %v723, %v725
    %v729 = vrot.slane %v727, 4
    %v731 = vadd.f32 %v720, %v729
    %v732 = vmul.f32 %v731, 2.0
    %v733 = vand.u32 2147483647, %v732
    %v734 = vsub.f32 0.0, %v733
    %v735 = vmul.f32 %v734, 1.442695
    %v736 = vpow.pop %v735
    %vm737 = vcmp.ge.f32.partialorder %v731, 0.0
    %v738 = vsel %vm737, 1.0, -1.0
    %v739 = vsub.f32 1.0, %v736
    %v740 = vmul.f32 %v738, %v739
    %v741 = vadd.f32 %v736, 1.0
    %v742 = vrcp.pop %v741
    %v743 = vmul.f32 %v741, %v742
    %v744 = vsub.f32 1.0, %v743
    %v745 = vmul.f32 %v742, %v744
    %v746 = vadd.f32 %v742, %v745
    %vm747 = vweird.f32 %v741
    %vm748 = vweird.f32 %v742
    %vm749 = vmor %vm747, %vm748
    %v750 = vsel %vm749, %v742, %v746
    %v751 = vand.u32 2147483647, %v741
    %vm752 = vcmp.eq.f32.partialorder %v751, 8.507059e+37
    %v753 = vand.u32 %v741, 2147483648
    %v754 = vor.u32 1.1754944e-38, %v753
    %v755 = vsel %vm752, %v754, %v750
    %v756 = vmul.f32 %v740, %v755
    %757 = vst [vmem:[#allocation5] sm:$0xf] %v756
    %v758 = vmul.f32 %v69, -0.5
    %v759 = vmul.f32 %v758, %v69
    %v761 = vrot.slane %v720, 4
    %v763 = vsub.f32 %v759, %v761
    %v764 = vsub.f32 %v763, 0.9189385
    %v765 = vadd.f32 %v764, %v733
    %v766 = vsub.f32 %v765, 1.3862944
    %v767 = vadd.f32 %v736, 1.0
    %v768 = vlog2.pop %v767
    %v769 = vmul.f32 %v768, 0.6931472
    %v770 = vmul.f32 -0.5, %v736
    %v771 = vadd.f32 %v770, 1.0
    %v772 = vmul.f32 %v771, %v736
    %v773 = vand.u32 2147483647, %v736
    %vm774 = vcmp.lt.f32.partialorder %v773, 0.0004427343
    %v775 = vsel %vm774, %v772, %v769
    %v776 = vmul.f32 %v775, 2.0
    %v777 = vadd.f32 %v766, %v776
    %vm778 = vcmask 1043456
    %v779 = vsel %vm778, %v777, 0.0
    %v780 = vrot.slane %v779, 4
    %v781 = vadd.f32 %v779, %v780
    %v782 = vrot.slane %v781, 2
    %v783 = vadd.f32 %v781, %v782
    %v784 = vrot.slane %v783, 1
    %v785 = vadd.f32 %v783, %v784
    %786 = vst [vmem:[#allocation6] sm:$0x1] %v785
    // Predicated region
    $region22: #{tpu_custom_call.1} parent=1 // pred_check
      _
    $region23: #{tpu_custom_call.1} parent=1 // pred_check_branch
      %788 = sbr.rel (0) target = $region25
    $region24: #{tpu_custom_call.1} parent=1 // pred_region
      %790 = vsyncadd [#allocation4], 0
      %s792 = sshll.u32 [#allocation5], 4
      %s793 = int_to_ptr.vmem [resolvable:$true] %s792
      %s794 = sshll.u32 %s4, 4
      %s795 = int_to_ptr.hbm [resolvable:$true] %s794
      %797 = dma.vmem_to_hbm [thread:$0]  %s793, 64, %s795, [#allocation4]
    $region25: #{tpu_custom_call.1} parent=1 // pred_fallthru
      _
    // Predicated region
    $region26: #{tpu_custom_call.1} parent=1 // pred_check
      _
    $region27: #{tpu_custom_call.1} parent=1 // pred_check_branch
      %799 = sbr.rel (0) target = $region29
    $region28: #{tpu_custom_call.1} parent=1 // pred_region
      %801 = vsyncadd [#allocation7], 0
      %s803 = sshll.u32 [#allocation6], 4
      %s804 = int_to_ptr.vmem [resolvable:$true] %s803
      %s805 = sshll.u32 %s5, 4
      %s806 = int_to_ptr.hbm [resolvable:$true] %s805
      %808 = dma.vmem_to_hbm [thread:$0]  %s804, 16, %s806, [#allocation7]
    $region29: #{tpu_custom_call.1} parent=1 // pred_fallthru
      _
    // Predicated region
    $region30: #{tpu_custom_call.1} parent=1 // pred_check
      _
    $region31: #{tpu_custom_call.1} parent=1 // pred_check_branch
      %810 = sbr.rel (0) target = $region33
    $region32: #{tpu_custom_call.1} parent=1 // pred_region
      %812 = dma.done [#allocation4], 64
    $region33: #{tpu_custom_call.1} parent=1 // pred_fallthru
      _
    // Predicated region
    $region34: #{tpu_custom_call.1} parent=1 // pred_check
      _
    $region35: #{tpu_custom_call.1} parent=1 // pred_check_branch
      %814 = sbr.rel (0) target = $region37
    $region36: #{tpu_custom_call.1} parent=1 // pred_region
      %816 = dma.done [#allocation7], 16
    $region37: #{tpu_custom_call.1} parent=1 // pred_fallthru
      _
    %817 = vsyncpa [#allocation3], 1
    %818 = vsyncpa [#allocation4], 1
    %819 = vsyncpa [#allocation7], 1

</llo_original>
